<compile_context>
chip_gen: v6e
topology: v6e:2x2x1
jax: 0.10.0
libtpu: 0.0.40
codegen_flags: <defaults>
</compile_context>

<pallas_src>
import jax
import jax.numpy as jnp
from jax.experimental import pallas as pl
from jax.experimental.pallas import tpu as pltpu

C_IN = 86
C_OUT = 2064

# Number of output-channel blocks: 2 -> both v7x TensorCores get used, and on
# single-TC chips (v5e/v6e) it is only one extra (pipelined) grid step.
N_COUT_BLOCKS = 2
LANE = 128
_BLOCK_MULT = N_COUT_BLOCKS * LANE
# Pad C_OUT so every per-block lane dimension is a multiple of 128.
C_OUT_PAD = ((C_OUT + _BLOCK_MULT - 1) // _BLOCK_MULT) * _BLOCK_MULT  # 2304


def conv1x1_kernel(x_ref, w_ref, b_ref, o_ref):
    # x_ref: [M, C_IN] f32, w_ref: [C_IN, C_blk] bf16,
    # b_ref: [1, C_blk] f32,  o_ref: [M, C_blk] f32
    acc = jnp.dot(
        x_ref[...].astype(jnp.bfloat16),
        w_ref[...],
        preferred_element_type=jnp.float32,
    )
    o_ref[...] = (acc + b_ref[...]).astype(o_ref.dtype)


def prepare_conv_params(weight, bias):
    """One-time parameter prep (do this OUTSIDE the per-call forward path).

    weight: [C_OUT, C_IN, 1, 1] f32 -> [C_IN, C_OUT_PAD] bf16 (pre-transposed,
    zero-padded, cast once).  bias: [C_OUT] f32 -> [1, C_OUT_PAD] f32.
    """
    c_out, c_in = weight.shape[0], weight.shape[1]
    w_mat = weight.reshape(c_out, c_in).T.astype(jnp.bfloat16)      # [C_IN, C_OUT]
    w_mat = jnp.pad(w_mat, ((0, 0), (0, C_OUT_PAD - c_out)))        # [C_IN, C_OUT_PAD]
    b_mat = jnp.pad(bias.astype(jnp.float32), (0, C_OUT_PAD - c_out))
    b_mat = b_mat.reshape(1, C_OUT_PAD)
    return w_mat, b_mat


def conv2d_1x1(x_nchw, w_prepared, b_prepared, c_out=C_OUT):
    """x_nchw: [N, C_IN, H, W] f32; w_prepared/b_prepared from prepare_conv_params.

    Returns [N, c_out, H, W] f32 (H == W == 1 here, but handled generally).
    """
    n, c_in, h, w = x_nchw.shape
    assert w_prepared.shape == (c_in, C_OUT_PAD)
    assert b_prepared.shape == (1, C_OUT_PAD)

    # Flatten to a matmul: [M, C_IN] @ [C_IN, C_OUT_PAD]
    x_flat = jnp.transpose(x_nchw, (0, 2, 3, 1)).reshape(n * h * w, c_in)
    m = x_flat.shape[0]
    c_blk = C_OUT_PAD // N_COUT_BLOCKS  # 1152 = 9 * 128 -> lane-dense

    cost = pl.CostEstimate(
        flops=2 * m * c_in * C_OUT_PAD,
        transcendentals=0,
        bytes_accessed=(
            m * c_in * 4               # x (f32)
            + c_in * C_OUT_PAD * 2     # weight (bf16)
            + C_OUT_PAD * 4            # bias (f32)
            + m * C_OUT_PAD * 4        # output (f32)
        ),
    )

    out_flat = pl.pallas_call(
        conv1x1_kernel,
        out_shape=jax.ShapeDtypeStruct((m, C_OUT_PAD), x_flat.dtype),
        grid_spec=pltpu.PrefetchScalarGridSpec(
            num_scalar_prefetch=0,
            grid=(N_COUT_BLOCKS,),
            in_specs=[
                pl.BlockSpec((m, c_in), lambda j: (0, 0)),
                pl.BlockSpec((c_in, c_blk), lambda j: (0, j)),
                pl.BlockSpec((1, c_blk), lambda j: (0, j)),
            ],
            out_specs=pl.BlockSpec((m, c_blk), lambda j: (0, j)),
        ),
        compiler_params=pltpu.CompilerParams(
            dimension_semantics=("parallel",),
        ),
        cost_estimate=cost,
    )(x_flat, w_prepared, b_prepared)

    # Drop the zero-padded columns and go back to NCHW.
    out_flat = out_flat[:, :c_out]
    return jnp.transpose(out_flat.reshape(n, h, w, c_out), (0, 3, 1, 2))


if __name__ == "__main__":
    key = jax.random.PRNGKey(0)
    kx, kw, kb = jax.random.split(key, 3)

    # Matches M.forward input: x583 = randn([1, 86, 1, 1])
    x = jax.random.normal(kx, (1, C_IN, 1, 1), dtype=jnp.float32)

    # Deterministic parameter init (Conv2d(86, 2064, kernel_size=1) shapes).
    fan_in = C_IN  # 1x1 kernel
    bound = 1.0 / (fan_in ** 0.5)
    weight = jax.random.uniform(
        kw, (C_OUT, C_IN, 1, 1), dtype=jnp.float32, minval=-bound, maxval=bound
    )
    bias = jax.random.uniform(
        kb, (C_OUT,), dtype=jnp.float32, minval=-bound, maxval=bound
    )

    # One-time parameter prep (pre-transpose / pad / bf16 cast) outside the call.
    w_prep, b_prep = prepare_conv_params(weight, bias)
    w_prep, b_prep = jax.block_until_ready((w_prep, b_prep))

    out = conv2d_1x1(x, w_prep, b_prep)
    out = jax.block_until_ready(out)

    # Reference check against plain-JAX f32 computation (tolerance loosened for
    # bf16 weights with f32 accumulation).
    ref = (
        jnp.einsum("nchw,oc->nohw", x, weight.reshape(C_OUT, C_IN))
        + bias.reshape(1, C_OUT, 1, 1)
    )
    assert out.shape == (1, C_OUT, 1, 1), out.shape
    assert jnp.allclose(out, ref, atol=5e-2, rtol=5e-2), float(
        jnp.max(jnp.abs(out - ref))
    )

    print("KERNEL_OK")
</pallas_src>

<mosaic_0001>
module attributes {stable_mosaic.version = 11 : i64} {
  func.func @conv1x1_kernel(%arg0: i32, %arg1: memref<1x86xf32, #tpu.memory_space<vmem>>, %arg2: memref<86x1152xbf16, #tpu.memory_space<vmem>>, %arg3: memref<1x1152xf32, #tpu.memory_space<vmem>>, %arg4: memref<1x1152xf32, #tpu.memory_space<vmem>>) attributes {dimension_semantics = [#tpu.dimension_semantics<parallel>], iteration_bounds = array<i64: 2>, scalar_prefetch = 0 : i64, scratch_operands = 0 : i64, tpu.core_type = #tpu.core_type<tc>, window_params = [{pipeline_mode = #tpu.pipeline_mode<synchronous>, transform_indices = @transform_0, window_bounds = array<i64: 1, 86>}, {transform_indices = @transform_1, window_bounds = array<i64: 86, 1152>}, {transform_indices = @transform_2, window_bounds = array<i64: 1, 1152>}, {transform_indices = @transform_3, window_bounds = array<i64: 1, 1152>}]} {
    %c0 = arith.constant 0 : index
    %c0_0 = arith.constant 0 : index
    %0 = vector.load %arg1[%c0, %c0_0] : memref<1x86xf32, #tpu.memory_space<vmem>>, vector<1x86xf32>
    %1 = arith.truncf %0 : vector<1x86xf32> to vector<1x86xbf16>
    %c0_1 = arith.constant 0 : index
    %c0_2 = arith.constant 0 : index
    %2 = vector.load %arg2[%c0_1, %c0_2] : memref<86x1152xbf16, #tpu.memory_space<vmem>>, vector<86x1152xbf16>
    %cst = arith.constant dense<0.000000e+00> : vector<1x1152xf32>
    %3 = tpu.matmul %1, %2, %cst {dimension_numbers = #tpu.dot_dimension_numbers<[1], [0], [0], [1], [0, 0, 1, 1], [], []>} : vector<1x86xbf16>, vector<86x1152xbf16>, vector<1x1152xf32> -> vector<1x1152xf32>
    %c0_3 = arith.constant 0 : index
    %c0_4 = arith.constant 0 : index
    %4 = vector.load %arg3[%c0_3, %c0_4] : memref<1x1152xf32, #tpu.memory_space<vmem>>, vector<1x1152xf32>
    %5 = arith.addf %3, %4 : vector<1x1152xf32>
    %c0_5 = arith.constant 0 : index
    %c0_6 = arith.constant 0 : index
    %6 = vector.load %arg4[%c0_5, %c0_6] : memref<1x1152xf32, #tpu.memory_space<vmem>>, vector<1x1152xf32>
    tpu.vector_store %arg4[%c0_5, %c0_6], %5 {strides = array<i32>} : memref<1x1152xf32, #tpu.memory_space<vmem>>, vector<1x1152xf32>,
    return
  }
  func.func @transform_0(%arg0: i32) -> (i32, i32) {
    %c0_i32 = arith.constant 0 : i32
    %c0_i32_0 = arith.constant 0 : i32
    %c0_i32_1 = arith.constant 0 : i32
    return %c0_i32, %c0_i32_0 : i32, i32
  }
  func.func @transform_1(%arg0: i32) -> (i32, i32) {
    %c0_i32 = arith.constant 0 : i32
    %c0_i32_0 = arith.constant 0 : i32
    return %c0_i32, %arg0 : i32, i32
  }
  func.func @transform_2(%arg0: i32) -> (i32, i32) {
    %c0_i32 = arith.constant 0 : i32
    %c0_i32_0 = arith.constant 0 : i32
    return %c0_i32, %arg0 : i32, i32
  }
  func.func @transform_3(%arg0: i32) -> (i32, i32) {
    %c0_i32 = arith.constant 0 : i32
    %c0_i32_0 = arith.constant 0 : i32
    return %c0_i32, %arg0 : i32, i32
  }
}

</mosaic_0001>

<llo_original>
// kernel: tpu_custom_call.1
$region0: #{tpu_custom_call.1}
  #allocation0 [shape = 'u32[]', space=smem, size = 0x4, offset = 0x4, fixed_abs, tag = 'smem constant byte address 0x4 - core index']
  #allocation1 [shape = 'u32[144,128]{1,0:T(1,128)}', space=vmem, size = 0x12000, scoped, tag = 'internal scratch']
  %s0 = inlined_call_operand.hbm [shape: f32[1,86], index: 0, kind: input, shape index: {}]
  %s1 = inlined_call_operand.hbm [shape: bf16[86,2304], index: 1, kind: input, shape index: {}]
  %s2 = inlined_call_operand.hbm [shape: f32[1,2304], index: 2, kind: input, shape index: {}]
  %s3 = inlined_call_operand.hbm [shape: f32[1,2304], index: 3, kind: output, shape index: {}]
  %s4 = sld [smem:[#allocation0]]
  $region57: #{tpu_custom_call.1} parent=0
    _
  %s6 = ssub.s32 1, %s4
  %s7 = scalar_select 0, %s6, %s4
  $region1: #{tpu_custom_call.1} parent=0
    #allocation2 [shape = 'u8[512]{0}', space=vmem, size = 0x400, scoped, tag = 'input window, operand 0, single buffered']
    #allocation3 [shape = 's32[2]{0}', space=sflag, size = 0x8, scoped, tag = 'scoped memory for tpu_custom_call.1']
    #allocation4 [shape = 's32[2]{0}', space=sflag, size = 0x8, scoped, tag = 'scoped memory for tpu_custom_call.1']
    #allocation5 [shape = 'u8[405504]{0}', space=vmem, size = 0x63000, scoped, tag = 'input window, operand 1']
    #allocation6 [shape = 's32[2]{0}', space=sflag, size = 0x8, scoped, tag = 'scoped memory for tpu_custom_call.1']
    #allocation7 [shape = 'u8[9216]{0}', space=vmem, size = 0x2400, scoped, tag = 'input window, operand 2']
    #allocation8 [shape = 'u8[9216]{0}', space=vmem, size = 0x2400, scoped, tag = 'output window, operand 0']
    %8 = vsyncpa [#allocation3], 0
    %9 = vsyncpa [#allocation6], 0
    %s10 = scalar_lea.sflag [#allocation6], 1
    %11 = vsyncpa %s10, 0
    %12 = vsyncpa [#allocation4], 0
    %s13 = scalar_lea.sflag [#allocation4], 1
    %14 = vsyncpa %s13, 0
    loop: start=0, step=1, limit=4
    $region2: #{tpu_custom_call.1} parent=1 // loop_pre_header
      _
    $region3: #{tpu_custom_call.1} parent=1 // loop_header
      %s16 = sphi 0, %s20
      %p17 = scmp.ge.s32.totalorder %s16, 4
      %s24 = sphi 0, %s24
      %s26 = sphi 0, %s24
      %s27 = sphi 0, %s26
      %s41 = sphi 0, %s27
      %s47 = sphi 0, %s49
      %s50 = sphi 0, %s47
      %s51 = sphi 0, %s50
      %s67 = sphi 0, %s51
      %s73 = sphi 0, %s75
      %s76 = sphi 0, %s73
      %s77 = sphi 0, %s76
      %s93 = sphi 0, %s77
      %s99 = sphi 0, %s101
      %s102 = sphi 0, %s99
      %s103 = sphi 0, %s102
      %s119 = sphi 0, %s103
    $region4: #{tpu_custom_call.1} parent=1 // loop_header_branch
      %19 = sbr.rel (%p17) target = $region8
    $region5: #{tpu_custom_call.1} parent=1 // loop_body
      %s21 = ssub.s32 %s16, 1
      %s22 = ssub.s32 %s16, 2
      %s23 = sadd.s32 %s16, 1
      %s25 = sadd.s32 %s24, 1
      %p28 = scmp.eq.s32.totalorder %s16, 1
      %p29 = scmp.ne.s32.totalorder %s24, %s26
      %p30 = scmp.eq.s32.totalorder %s16, 0
      %p31 = por %p29, %p30
      %p32 = scmp.ne.s32.totalorder %s24, %s26
      %p33 = scmp.eq.s32.totalorder %s21, 1
      %p34 = por %p32, %p33
      %p35 = scmp.ne.s32.totalorder %s26, %s27
      %p36 = scmp.eq.s32.totalorder %s21, 0
      %p37 = por %p35, %p36
      %p38 = scmp.ne.s32.totalorder %s26, %s27
      %p39 = scmp.eq.s32.totalorder %s22, 1
      %p40 = por %p38, %p39
      %p42 = scmp.ne.s32.totalorder %s27, %s41
      %p43 = scmp.eq.s32.totalorder %s22, 0
      %p44 = por %p42, %p43
      %s45 = ssub.s32 %s16, %s23
      %p46 = scmp.eq.s32.totalorder %s45, 0
      %s48 = sadd.s32 %s47, 1
      %s49 = scalar_select %p46, %s47, %s48
      %p52 = pneg %p46
      %p53 = scmp.eq.s32.totalorder %s16, 1
      %p54 = por %p52, %p53
      %p55 = scmp.ne.s32.totalorder %s47, %s50
      %p56 = scmp.eq.s32.totalorder %s16, 0
      %p57 = por %p55, %p56
      %p58 = scmp.ne.s32.totalorder %s47, %s50
      %p59 = scmp.eq.s32.totalorder %s21, 1
      %p60 = por %p58, %p59
      %p61 = scmp.ne.s32.totalorder %s50, %s51
      %p62 = scmp.eq.s32.totalorder %s21, 0
      %p63 = por %p61, %p62
      %p64 = scmp.ne.s32.totalorder %s50, %s51
      %p65 = scmp.eq.s32.totalorder %s22, 1
      %p66 = por %p64, %p65
      %p68 = scmp.ne.s32.totalorder %s51, %s67
      %p69 = scmp.eq.s32.totalorder %s22, 0
      %p70 = por %p68, %p69
      %s71 = ssub.s32 %s16, %s23
      %p72 = scmp.eq.s32.totalorder %s71, 0
      %s74 = sadd.s32 %s73, 1
      %s75 = scalar_select %p72, %s73, %s74
      %p78 = pneg %p72
      %p79 = scmp.eq.s32.totalorder %s16, 1
      %p80 = por %p78, %p79
      %p81 = scmp.ne.s32.totalorder %s73, %s76
      %p82 = scmp.eq.s32.totalorder %s16, 0
      %p83 = por %p81, %p82
      %p84 = scmp.ne.s32.totalorder %s73, %s76
      %p85 = scmp.eq.s32.totalorder %s21, 1
      %p86 = por %p84, %p85
      %p87 = scmp.ne.s32.totalorder %s76, %s77
      %p88 = scmp.eq.s32.totalorder %s21, 0
      %p89 = por %p87, %p88
      %p90 = scmp.ne.s32.totalorder %s76, %s77
      %p91 = scmp.eq.s32.totalorder %s22, 1
      %p92 = por %p90, %p91
      %p94 = scmp.ne.s32.totalorder %s77, %s93
      %p95 = scmp.eq.s32.totalorder %s22, 0
      %p96 = por %p94, %p95
      %s97 = ssub.s32 %s16, %s23
      %p98 = scmp.eq.s32.totalorder %s97, 0
      %s100 = sadd.s32 %s99, 1
      %s101 = scalar_select %p98, %s99, %s100
      %p104 = pneg %p98
      %p105 = scmp.eq.s32.totalorder %s16, 1
      %p106 = por %p104, %p105
      %p107 = scmp.ne.s32.totalorder %s99, %s102
      %p108 = scmp.eq.s32.totalorder %s16, 0
      %p109 = por %p107, %p108
      %p110 = scmp.ne.s32.totalorder %s99, %s102
      %p111 = scmp.eq.s32.totalorder %s21, 1
      %p112 = por %p110, %p111
      %p113 = scmp.ne.s32.totalorder %s102, %s103
      %p114 = scmp.eq.s32.totalorder %s21, 0
      %p115 = por %p113, %p114
      %p116 = scmp.ne.s32.totalorder %s102, %s103
      %p117 = scmp.eq.s32.totalorder %s22, 1
      %p118 = por %p116, %p117
      %p120 = scmp.ne.s32.totalorder %s103, %s119
      %p121 = scmp.eq.s32.totalorder %s22, 0
      %p122 = por %p120, %p121
      %p123 = scmp.le.s32.totalorder 1, %s16
      %p124 = scmp.lt.s32.totalorder %s16, 3
      %p125 = pnand %p123, %p124
      %p126 = pneg %p125
      // Predicated region
      $region9: #{tpu_custom_call.1} parent=5 // pred_check
        _
      $region10: #{tpu_custom_call.1} parent=5 // pred_check_branch
        %128 = sbr.rel (%p125) target = $region12
      $region11: #{tpu_custom_call.1} parent=5 // pred_region
        %s129 = ssub.s32 %s16, 1
        // Predicated region
        $region13: #{tpu_custom_call.1} parent=11 // pred_check
          %p130 = pneg %p37
        $region14: #{tpu_custom_call.1} parent=11 // pred_check_branch
          %132 = sbr.rel (%p130) target = $region16
        $region15: #{tpu_custom_call.1} parent=11 // pred_region
          %s134 = ssub.s32 16, 16
          %135 = vsyncadd [#allocation3], %s134
          %s137 = sshll.u32 [#allocation2], 4
          %s138 = int_to_ptr.vmem [resolvable:$true] %s137
          %140 = dma.hbm_to_vmem [thread:$0]  %s0, 16, %s138, [#allocation3]
        $region16: #{tpu_custom_call.1} parent=11 // pred_fallthru
          _
      $region12: #{tpu_custom_call.1} parent=5 // pred_fallthru
        _
      %p141 = scmp.lt.s32.totalorder %s16, 2
      // Predicated region
      $region17: #{tpu_custom_call.1} parent=5 // pred_check
        %p142 = pneg %p141
      $region18: #{tpu_custom_call.1} parent=5 // pred_check_branch
        %144 = sbr.rel (%p142) target = $region20
      $region19: #{tpu_custom_call.1} parent=5 // pred_region
        // Predicated region
        $region21: #{tpu_custom_call.1} parent=19 // pred_check
          %p145 = pneg %p57
        $region22: #{tpu_custom_call.1} parent=19 // pred_check_branch
          %147 = sbr.rel (%p145) target = $region24
        $region23: #{tpu_custom_call.1} parent=19 // pred_region
          %s148 = sand.u32 %s16, 1
          %s149 = scalar_lea.sflag [#allocation6], %s148
          %s150 = sand.u32 %s47, 1
          %s151 = smul.addr %s150, 396
          %s152 = scalar_lea.vmem [#allocation5], %s151
          %s153 = smul.u32 9, %s16
          %s155 = ssub.s32 6336, 6336
          %156 = vsyncadd %s149, %s155
          %s157 = smul.addr %s153, 64
          %s158 = scalar_lea.hbm %s1, %s157
          %s159 = sshll.u32 %s152, 4
          %s160 = int_to_ptr.vmem [resolvable:$true] %s159
          %165 = dma.hbm_to_vmem [thread:$0]  %s158, 6336, %s160, %s149, 1152, 576, 36
        $region24: #{tpu_custom_call.1} parent=19 // pred_fallthru
          _
        // Predicated region
        $region25: #{tpu_custom_call.1} parent=19 // pred_check
          %p166 = pneg %p83
        $region26: #{tpu_custom_call.1} parent=19 // pred_check_branch
          %168 = sbr.rel (%p166) target = $region28
        $region27: #{tpu_custom_call.1} parent=19 // pred_region
          %s169 = sand.u32 %s16, 1
          %s170 = scalar_lea.sflag [#allocation6], %s169
          %s171 = sand.u32 %s73, 1
          %s172 = smul.addr %s171, 9
          %s173 = scalar_lea.vmem [#allocation7], %s172
          %s174 = smul.u32 9, %s16
          %s176 = ssub.s32 144, 144
          %177 = vsyncadd %s170, %s176
          %s178 = smul.addr %s174, 16
          %s179 = scalar_lea.hbm %s2, %s178
          %s181 = sshll.u32 %s173, 4
          %s182 = int_to_ptr.vmem [resolvable:$true] %s181
          %184 = dma.hbm_to_vmem [thread:$0]  %s179, 144, %s182, %s170
        $region28: #{tpu_custom_call.1} parent=19 // pred_fallthru
          _
      $region20: #{tpu_custom_call.1} parent=5 // pred_fallthru
        _
      %p185 = scmp.le.s32.totalorder 1, %s16
      %p186 = scmp.lt.s32.totalorder %s16, 3
      %p187 = pnand %p185, %p186
      %p188 = pneg %p187
      // Predicated region
      $region29: #{tpu_custom_call.1} parent=5 // pred_check
        _
      $region30: #{tpu_custom_call.1} parent=5 // pred_check_branch
        %190 = sbr.rel (%p187) target = $region32
      $region31: #{tpu_custom_call.1} parent=5 // pred_region
        %s191 = ssub.s32 %s16, 1
        // Predicated region
        $region33: #{tpu_custom_call.1} parent=31 // pred_check
          %p192 = pneg %p37
        $region34: #{tpu_custom_call.1} parent=31 // pred_check_branch
          %194 = sbr.rel (%p192) target = $region36
        $region35: #{tpu_custom_call.1} parent=31 // pred_region
          %195 = dma.done [#allocation3], 16
        $region36: #{tpu_custom_call.1} parent=31 // pred_fallthru
          _
        %s196 = sand.u32 %s21, 1
        %s197 = scalar_lea.sflag [#allocation6], %s196
        %s198 = sand.u32 %s50, 1
        %s199 = smul.addr %s198, 396
        %s200 = scalar_lea.vmem [#allocation5], %s199
        // Predicated region
        $region37: #{tpu_custom_call.1} parent=31 // pred_check
          %p201 = pneg %p63
        $region38: #{tpu_custom_call.1} parent=31 // pred_check_branch
          %203 = sbr.rel (%p201) target = $region40
        $region39: #{tpu_custom_call.1} parent=31 // pred_region
          %204 = dma.done %s197, 6336
        $region40: #{tpu_custom_call.1} parent=31 // pred_fallthru
          _
        %s205 = sand.u32 %s21, 1
        %s206 = scalar_lea.sflag [#allocation6], %s205
        %s207 = sand.u32 %s76, 1
        %s208 = smul.addr %s207, 9
        %s209 = scalar_lea.vmem [#allocation7], %s208
        // Predicated region
        $region41: #{tpu_custom_call.1} parent=31 // pred_check
          %p210 = pneg %p89
        $region42: #{tpu_custom_call.1} parent=31 // pred_check_branch
          %212 = sbr.rel (%p210) target = $region44
        $region43: #{tpu_custom_call.1} parent=31 // pred_region
          %213 = dma.done %s206, 144
        $region44: #{tpu_custom_call.1} parent=31 // pred_fallthru
          _
        %p214 = pneg %p37
        %p215 = pneg %p34
        %s216 = sand.u32 %s21, 1
        %s217 = scalar_lea.sflag [#allocation6], %s216
        %s218 = sand.u32 %s50, 1
        %s219 = smul.addr %s218, 396
        %s220 = scalar_lea.vmem [#allocation5], %s219
        %p221 = pneg %p63
        %p222 = pneg %p60
        %s223 = sand.u32 %s21, 1
        %s224 = scalar_lea.sflag [#allocation6], %s223
        %s225 = sand.u32 %s76, 1
        %s226 = smul.addr %s225, 9
        %s227 = scalar_lea.vmem [#allocation7], %s226
        %p228 = pneg %p89
        %p229 = pneg %p86
        %p230 = pneg %p115
        %p231 = pneg %p112
        %s232 = sand.u32 %s102, 1
        %s233 = scalar_lea.sflag [#allocation4], %s232
        %s234 = sand.u32 %s102, 1
        %s235 = smul.addr %s234, 9
        %s236 = scalar_lea.vmem [#allocation8], %s235
        %s237 = smul.u32 9, %s21
        %s238 = smul.u32 9, %s21
        %s239 = smul.u32 9, %s21
        %v241 = vld [vmem:[#allocation2] sm:$0x1]
        %v242 = vpack.c.bf16 %v241, %v241
        %v243 = vld [vmem:[%s200] sm:$0xff]
        %v244 = vld [vmem:[%s200 + $0x8] sm:$0xff]
        %v245 = vld [vmem:[%s200 + $0x10] sm:$0xff]
        %v246 = vld [vmem:[%s200 + $0x18] sm:$0xff]
        %v247 = vld [vmem:[%s200 + $0x20] sm:$0xf]
        %v248 = vld [vmem:[%s200 + $0x24] sm:$0xff]
        %v249 = vld [vmem:[%s200 + $0x2c] sm:$0xff]
        %v250 = vld [vmem:[%s200 + $0x34] sm:$0xff]
        %v251 = vld [vmem:[%s200 + $0x3c] sm:$0xff]
        %v252 = vld [vmem:[%s200 + $0x44] sm:$0xf]
        %v253 = vld [vmem:[%s200 + $0x48] sm:$0xff]
        %v254 = vld [vmem:[%s200 + $0x50] sm:$0xff]
        %v255 = vld [vmem:[%s200 + $0x58] sm:$0xff]
        %v256 = vld [vmem:[%s200 + $0x60] sm:$0xff]
        %v257 = vld [vmem:[%s200 + $0x68] sm:$0xf]
        %v258 = vld [vmem:[%s200 + $0x6c] sm:$0xff]
        %v259 = vld [vmem:[%s200 + $0x74] sm:$0xff]
        %v260 = vld [vmem:[%s200 + $0x7c] sm:$0xff]
        %v261 = vld [vmem:[%s200 + $0x84] sm:$0xff]
        %v262 = vld [vmem:[%s200 + $0x8c] sm:$0xf]
        %v263 = vld [vmem:[%s200 + $0x90] sm:$0xff]
        %v264 = vld [vmem:[%s200 + $0x98] sm:$0xff]
        %v265 = vld [vmem:[%s200 + $0xa0] sm:$0xff]
        %v266 = vld [vmem:[%s200 + $0xa8] sm:$0xff]
        %v267 = vld [vmem:[%s200 + $0xb0] sm:$0xf]
        %v268 = vld [vmem:[%s200 + $0xb4] sm:$0xff]
        %v269 = vld [vmem:[%s200 + $0xbc] sm:$0xff]
        %v270 = vld [vmem:[%s200 + $0xc4] sm:$0xff]
        %v271 = vld [vmem:[%s200 + $0xcc] sm:$0xff]
        %v272 = vld [vmem:[%s200 + $0xd4] sm:$0xf]
        %v273 = vld [vmem:[%s200 + $0xd8] sm:$0xff]
        %v274 = vld [vmem:[%s200 + $0xe0] sm:$0xff]
        %v275 = vld [vmem:[%s200 + $0xe8] sm:$0xff]
        %v276 = vld [vmem:[%s200 + $0xf0] sm:$0xff]
        %v277 = vld [vmem:[%s200 + $0xf8] sm:$0xf]
        %v278 = vld [vmem:[%s200 + $0xfc] sm:$0xff]
        %v279 = vld [vmem:[%s200 + $0x104] sm:$0xff]
        %v280 = vld [vmem:[%s200 + $0x10c] sm:$0xff]
        %v281 = vld [vmem:[%s200 + $0x114] sm:$0xff]
        %v282 = vld [vmem:[%s200 + $0x11c] sm:$0xf]
        %v283 = vld [vmem:[%s200 + $0x120] sm:$0xff]
        %v284 = vld [vmem:[%s200 + $0x128] sm:$0xff]
        %v285 = vld [vmem:[%s200 + $0x130] sm:$0xff]
        %v286 = vld [vmem:[%s200 + $0x138] sm:$0xff]
        %v287 = vld [vmem:[%s200 + $0x140] sm:$0xf]
        %v288 = vld [vmem:[%s200 + $0x144] sm:$0xff]
        %v289 = vld [vmem:[%s200 + $0x14c] sm:$0xff]
        %v290 = vld [vmem:[%s200 + $0x154] sm:$0xff]
        %v291 = vld [vmem:[%s200 + $0x15c] sm:$0xff]
        %v292 = vld [vmem:[%s200 + $0x164] sm:$0xf]
        %v293 = vld [vmem:[%s200 + $0x168] sm:$0x77]
        %v294 = vld [vmem:[%s200 + $0x170] sm:$0x77]
        %v295 = vld [vmem:[%s200 + $0x178] sm:$0x77]
        %v296 = vld [vmem:[%s200 + $0x180] sm:$0x77]
        %v297 = vld [vmem:[%s200 + $0x188] sm:$0x7]
        %v298 = vld [vmem:[%s209] sm:$0xff]
        %v299 = vld [vmem:[%s209 + $0x8] sm:$0x1]
        %v355 = vunpack.c.l.b16 %v243
        %v356 = vunpack.c.h.b16 %v243
        %v357 = vunpack.c.l.b16 %v244
        %v358 = vunpack.c.h.b16 %v244
        %v359 = vunpack.c.l.b16 %v245
        %v360 = vunpack.c.h.b16 %v245
        %v361 = vunpack.c.l.b16 %v246
        %v362 = vunpack.c.h.b16 %v246
        %v363 = vunpack.c.l.b16 %v247
        %v364 = vunpack.c.l.b16 %v248
        %v365 = vunpack.c.h.b16 %v248
        %v366 = vunpack.c.l.b16 %v249
        %v367 = vunpack.c.h.b16 %v249
        %v368 = vunpack.c.l.b16 %v250
        %v369 = vunpack.c.h.b16 %v250
        %v370 = vunpack.c.l.b16 %v251
        %v371 = vunpack.c.h.b16 %v251
        %v372 = vunpack.c.l.b16 %v252
        %v373 = vunpack.c.l.b16 %v253
        %v374 = vunpack.c.h.b16 %v253
        %v375 = vunpack.c.l.b16 %v254
        %v376 = vunpack.c.h.b16 %v254
        %v377 = vunpack.c.l.b16 %v255
        %v378 = vunpack.c.h.b16 %v255
        %v379 = vunpack.c.l.b16 %v256
        %v380 = vunpack.c.h.b16 %v256
        %v381 = vunpack.c.l.b16 %v257
        %v382 = vunpack.c.l.b16 %v258
        %v383 = vunpack.c.h.b16 %v258
        %v384 = vunpack.c.l.b16 %v259
        %v385 = vunpack.c.h.b16 %v259
        %v386 = vunpack.c.l.b16 %v260
        %v387 = vunpack.c.h.b16 %v260
        %v388 = vunpack.c.l.b16 %v261
        %v389 = vunpack.c.h.b16 %v261
        %v390 = vunpack.c.l.b16 %v262
        %v391 = vunpack.c.l.b16 %v263
        %v392 = vunpack.c.h.b16 %v263
        %v393 = vunpack.c.l.b16 %v264
        %v394 = vunpack.c.h.b16 %v264
        %v395 = vunpack.c.l.b16 %v265
        %v396 = vunpack.c.h.b16 %v265
        %v397 = vunpack.c.l.b16 %v266
        %v398 = vunpack.c.h.b16 %v266
        %v399 = vunpack.c.l.b16 %v267
        %v400 = vunpack.c.l.b16 %v268
        %v401 = vunpack.c.h.b16 %v268
        %v402 = vunpack.c.l.b16 %v269
        %v403 = vunpack.c.h.b16 %v269
        %v404 = vunpack.c.l.b16 %v270
        %v405 = vunpack.c.h.b16 %v270
        %v406 = vunpack.c.l.b16 %v271
        %v407 = vunpack.c.h.b16 %v271
        %v408 = vunpack.c.l.b16 %v272
        %v409 = vunpack.c.l.b16 %v273
        %v410 = vunpack.c.h.b16 %v273
        %v411 = vunpack.c.l.b16 %v274
        %v412 = vunpack.c.h.b16 %v274
        %v413 = vunpack.c.l.b16 %v275
        %v414 = vunpack.c.h.b16 %v275
        %v415 = vunpack.c.l.b16 %v276
        %v416 = vunpack.c.h.b16 %v276
        %v417 = vunpack.c.l.b16 %v277
        %v418 = vunpack.c.l.b16 %v278
        %v419 = vunpack.c.h.b16 %v278
        %v420 = vunpack.c.l.b16 %v279
        %v421 = vunpack.c.h.b16 %v279
        %v422 = vunpack.c.l.b16 %v280
        %v423 = vunpack.c.h.b16 %v280
        %v424 = vunpack.c.l.b16 %v281
        %v425 = vunpack.c.h.b16 %v281
        %v426 = vunpack.c.l.b16 %v282
        %v427 = vunpack.c.l.b16 %v283
        %v428 = vunpack.c.h.b16 %v283
        %v429 = vunpack.c.l.b16 %v284
        %v430 = vunpack.c.h.b16 %v284
        %v431 = vunpack.c.l.b16 %v285
        %v432 = vunpack.c.h.b16 %v285
        %v433 = vunpack.c.l.b16 %v286
        %v434 = vunpack.c.h.b16 %v286
        %v435 = vunpack.c.l.b16 %v287
        %v436 = vunpack.c.l.b16 %v288
        %v437 = vunpack.c.h.b16 %v288
        %v438 = vunpack.c.l.b16 %v289
        %v439 = vunpack.c.h.b16 %v289
        %v440 = vunpack.c.l.b16 %v290
        %v441 = vunpack.c.h.b16 %v290
        %v442 = vunpack.c.l.b16 %v291
        %v443 = vunpack.c.h.b16 %v291
        %v444 = vunpack.c.l.b16 %v292
        %v445 = vunpack.c.l.b16 %v293
        %v446 = vunpack.c.h.b16 %v293
        %v447 = vunpack.c.l.b16 %v294
        %v448 = vunpack.c.h.b16 %v294
        %v449 = vunpack.c.l.b16 %v295
        %v450 = vunpack.c.h.b16 %v295
        %v451 = vunpack.c.l.b16 %v296
        %v452 = vunpack.c.h.b16 %v296
        %v453 = vunpack.c.l.b16 %v297
        %v454 = vpack.c.b16 %v364, %v355
        %v455 = vpack.c.b16 %v365, %v356
        %v456 = vpack.c.b16 %v366, %v357
        %v457 = vpack.c.b16 %v367, %v358
        %v458 = vpack.c.b16 %v368, %v359
        %v459 = vpack.c.b16 %v369, %v360
        %v460 = vpack.c.b16 %v370, %v361
        %v461 = vpack.c.b16 %v371, %v362
        %v462 = vpack.c.b16 %v372, %v363
        %v463 = vpack.c.b16 %v382, %v373
        %v464 = vpack.c.b16 %v383, %v374
        %v465 = vpack.c.b16 %v384, %v375
        %v466 = vpack.c.b16 %v385, %v376
        %v467 = vpack.c.b16 %v386, %v377
        %v468 = vpack.c.b16 %v387, %v378
        %v469 = vpack.c.b16 %v388, %v379
        %v470 = vpack.c.b16 %v389, %v380
        %v471 = vpack.c.b16 %v390, %v381
        %v472 = vpack.c.b16 %v400, %v391
        %v473 = vpack.c.b16 %v401, %v392
        %v474 = vpack.c.b16 %v402, %v393
        %v475 = vpack.c.b16 %v403, %v394
        %v476 = vpack.c.b16 %v404, %v395
        %v477 = vpack.c.b16 %v405, %v396
        %v478 = vpack.c.b16 %v406, %v397
        %v479 = vpack.c.b16 %v407, %v398
        %v480 = vpack.c.b16 %v408, %v399
        %v481 = vpack.c.b16 %v418, %v409
        %v482 = vpack.c.b16 %v419, %v410
        %v483 = vpack.c.b16 %v420, %v411
        %v484 = vpack.c.b16 %v421, %v412
        %v485 = vpack.c.b16 %v422, %v413
        %v486 = vpack.c.b16 %v423, %v414
        %v487 = vpack.c.b16 %v424, %v415
        %v488 = vpack.c.b16 %v425, %v416
        %v489 = vpack.c.b16 %v426, %v417
        %v490 = vpack.c.b16 %v436, %v427
        %v491 = vpack.c.b16 %v437, %v428
        %v492 = vpack.c.b16 %v438, %v429
        %v493 = vpack.c.b16 %v439, %v430
        %v494 = vpack.c.b16 %v440, %v431
        %v495 = vpack.c.b16 %v441, %v432
        %v496 = vpack.c.b16 %v442, %v433
        %v497 = vpack.c.b16 %v443, %v434
        %v498 = vpack.c.b16 %v444, %v435
        %v499 = vpack.c.b16 %v445, %v445
        %v500 = vpack.c.b16 %v446, %v446
        %v501 = vpack.c.b16 %v447, %v447
        %v502 = vpack.c.b16 %v448, %v448
        %v503 = vpack.c.b16 %v449, %v449
        %v504 = vpack.c.b16 %v450, %v450
        %v505 = vpack.c.b16 %v451, %v451
        %v506 = vpack.c.b16 %v452, %v452
        %v507 = vpack.c.b16 %v453, %v453
        %v555 = vlaneseq
        %v556 = vshrl.u32 %v555, 7
        %v557 = vsub.s32 0, %v556
        %v558 = vrot.slane %v298, %v557
        %v559 = vlaneseq
        %v560 = vshrl.u32 %v559, 7
        %v561 = vsub.s32 1, %v560
        %v562 = vrot.slane %v298, %v561
        %v563 = vlaneseq
        %v564 = vshrl.u32 %v563, 7
        %v565 = vsub.s32 2, %v564
        %v566 = vrot.slane %v298, %v565
        %v567 = vlaneseq
        %v568 = vshrl.u32 %v567, 7
        %v569 = vsub.s32 3, %v568
        %v570 = vrot.slane %v298, %v569
        %v571 = vlaneseq
        %v572 = vshrl.u32 %v571, 7
        %v573 = vsub.s32 4, %v572
        %v574 = vrot.slane %v298, %v573
        %v575 = vlaneseq
        %v576 = vshrl.u32 %v575, 7
        %v577 = vsub.s32 5, %v576
        %v578 = vrot.slane %v298, %v577
        %v579 = vlaneseq
        %v580 = vshrl.u32 %v579, 7
        %v581 = vsub.s32 6, %v580
        %v582 = vrot.slane %v298, %v581
        %v583 = vlaneseq
        %v584 = vshrl.u32 %v583, 7
        %v585 = vsub.s32 7, %v584
        %v586 = vrot.slane %v298, %v585
        %v587 = vlaneseq
        %v588 = vshrl.u32 %v587, 7
        %v589 = vsub.s32 0, %v588
        %v590 = vrot.slane %v299, %v589
        %vm600 = vcmask 703488
        %v602 = vsel %vm600, %v242, 0
        %vm604 = vcmask 1042432
        %v606 = vsel %vm604, %v499, 0
        %v609 = vsel %vm604, %v500, 0
        %v612 = vsel %vm604, %v501, 0
        %v615 = vsel %vm604, %v502, 0
        %v618 = vsel %vm604, %v503, 0
        %v621 = vsel %vm604, %v504, 0
        %v624 = vsel %vm604, %v505, 0
        %v627 = vsel %vm604, %v506, 0
        %v630 = vsel %vm604, %v507, 0
        %632 = vmatprep.subr.bf16.mxu0 0
        %633 = vmatpush1.bf16.msra.mxu0 0
        %634 = vmatprep.subr.bf16.mxu0 0
        %635 = vmatpush1.bf16.msra.mxu0 0
        %636 = vmatprep.subr.bf16.mxu0 %v609
        %637 = vmatpush1.bf16.msra.mxu0 %v606
        %638 = vmatprep.subr.bf16.mxu0 %v491
        %639 = vmatpush1.bf16.msra.mxu0 %v490
        %640 = vmatprep.subr.bf16.mxu0 %v482
        %641 = vmatpush1.bf16.msra.mxu0 %v481
        %642 = vmatprep.subr.bf16.mxu0 %v473
        %643 = vmatpush1.bf16.msra.mxu0 %v472
        %644 = vmatprep.subr.bf16.mxu0 %v464
        %645 = vmatpush1.bf16.msra.mxu0 %v463
        %646 = vmatprep.subr.bf16.mxu0 %v455
        %647 = vmatpush1.bf16.msra.mxu0 %v454
        %648 = vmatprep.subr.bf16.mxu0 0
        %649 = vmatpush2.bf16.msra.mxu0 0
        %650 = vmatprep.subr.bf16.mxu0 0
        %651 = vmatpush2.bf16.msra.mxu0 0
        %652 = vmatprep.subr.bf16.mxu0 0
        %653 = vmatpush2.bf16.msra.mxu0 0
        %654 = vmatprep.subr.bf16.mxu0 0
        %655 = vmatpush2.bf16.msra.mxu0 0
        %656 = vmatprep.subr.bf16.mxu0 0
        %657 = vmatpush2.bf16.msra.mxu0 0
        %658 = vmatprep.subr.bf16.mxu0 0
        %659 = vmatpush2.bf16.msra.mxu0 0
        %660 = vmatprep.subr.bf16.mxu0 0
        %661 = vmatpush2.bf16.msra.mxu0 0
        %662 = vmatprep.subr.bf16.mxu0 0
        %663 = vmatpush2.bf16.msra.mxu0 0
        %664 = vmatprep.mubr.bf16.mxu0 0
        %665 = vmatmul.mubr.bf16.gmra.mxu0 %v602
        %v666 = vpop.f32.mrf.mxu0
        %v667 = vadd.f32 %v558, %v666
        %v668 = vpop.f32.mrf.mxu0
        %v669 = vadd.f32 %v562, %v668
        %v670 = vpop.f32.mrf.mxu0
        %v671 = vpop.f32.mrf.mxu0
        %672 = vdwg.mxu0
        %673 = vmatprep.subr.bf16.mxu0 0
        %674 = vmatpush1.bf16.msra.mxu0 0
        %675 = vmatprep.subr.bf16.mxu0 0
        %676 = vmatpush1.bf16.msra.mxu0 0
        %677 = vmatprep.subr.bf16.mxu0 %v615
        %678 = vmatpush1.bf16.msra.mxu0 %v612
        %679 = vmatprep.subr.bf16.mxu0 %v493
        %680 = vmatpush1.bf16.msra.mxu0 %v492
        %681 = vmatprep.subr.bf16.mxu0 %v484
        %682 = vmatpush1.bf16.msra.mxu0 %v483
        %683 = vmatprep.subr.bf16.mxu0 %v475
        %684 = vmatpush1.bf16.msra.mxu0 %v474
        %685 = vmatprep.subr.bf16.mxu0 %v466
        %686 = vmatpush1.bf16.msra.mxu0 %v465
        %687 = vmatprep.subr.bf16.mxu0 %v457
        %688 = vmatpush1.bf16.msra.mxu0 %v456
        %689 = vmatprep.subr.bf16.mxu0 0
        %690 = vmatpush2.bf16.msra.mxu0 0
        %691 = vmatprep.subr.bf16.mxu0 0
        %692 = vmatpush2.bf16.msra.mxu0 0
        %693 = vmatprep.subr.bf16.mxu0 0
        %694 = vmatpush2.bf16.msra.mxu0 0
        %695 = vmatprep.subr.bf16.mxu0 0
        %696 = vmatpush2.bf16.msra.mxu0 0
        %697 = vmatprep.subr.bf16.mxu0 0
        %698 = vmatpush2.bf16.msra.mxu0 0
        %699 = vmatprep.subr.bf16.mxu0 0
        %700 = vmatpush2.bf16.msra.mxu0 0
        %701 = vmatprep.subr.bf16.mxu0 0
        %702 = vmatpush2.bf16.msra.mxu0 0
        %703 = vmatprep.subr.bf16.mxu0 0
        %704 = vmatpush2.bf16.msra.mxu0 0
        %705 = vmatprep.mubr.bf16.mxu0 0
        %706 = vmatmul.mubr.bf16.gmra.mxu0 %v602
        %v707 = vpop.f32.mrf.mxu0
        %v708 = vadd.f32 %v566, %v707
        %v709 = vpop.f32.mrf.mxu0
        %v710 = vadd.f32 %v570, %v709
        %v711 = vpop.f32.mrf.mxu0
        %v712 = vpop.f32.mrf.mxu0
        %713 = vdwg.mxu0
        %714 = vmatprep.subr.bf16.mxu0 0
        %715 = vmatpush1.bf16.msra.mxu0 0
        %716 = vmatprep.subr.bf16.mxu0 0
        %717 = vmatpush1.bf16.msra.mxu0 0
        %718 = vmatprep.subr.bf16.mxu0 %v621
        %719 = vmatpush1.bf16.msra.mxu0 %v618
        %720 = vmatprep.subr.bf16.mxu0 %v495
        %721 = vmatpush1.bf16.msra.mxu0 %v494
        %722 = vmatprep.subr.bf16.mxu0 %v486
        %723 = vmatpush1.bf16.msra.mxu0 %v485
        %724 = vmatprep.subr.bf16.mxu0 %v477
        %725 = vmatpush1.bf16.msra.mxu0 %v476
        %726 = vmatprep.subr.bf16.mxu0 %v468
        %727 = vmatpush1.bf16.msra.mxu0 %v467
        %728 = vmatprep.subr.bf16.mxu0 %v459
        %729 = vmatpush1.bf16.msra.mxu0 %v458
        %730 = vmatprep.subr.bf16.mxu0 0
        %731 = vmatpush2.bf16.msra.mxu0 0
        %732 = vmatprep.subr.bf16.mxu0 0
        %733 = vmatpush2.bf16.msra.mxu0 0
        %734 = vmatprep.subr.bf16.mxu0 0
        %735 = vmatpush2.bf16.msra.mxu0 0
        %736 = vmatprep.subr.bf16.mxu0 0
        %737 = vmatpush2.bf16.msra.mxu0 0
        %738 = vmatprep.subr.bf16.mxu0 0
        %739 = vmatpush2.bf16.msra.mxu0 0
        %740 = vmatprep.subr.bf16.mxu0 0
        %741 = vmatpush2.bf16.msra.mxu0 0
        %742 = vmatprep.subr.bf16.mxu0 0
        %743 = vmatpush2.bf16.msra.mxu0 0
        %744 = vmatprep.subr.bf16.mxu0 0
        %745 = vmatpush2.bf16.msra.mxu0 0
        %746 = vmatprep.mubr.bf16.mxu0 0
        %747 = vmatmul.mubr.bf16.gmra.mxu0 %v602
        %v748 = vpop.f32.mrf.mxu0
        %v749 = vadd.f32 %v574, %v748
        %v750 = vpop.f32.mrf.mxu0
        %v751 = vadd.f32 %v578, %v750
        %v752 = vpop.f32.mrf.mxu0
        %v753 = vpop.f32.mrf.mxu0
        %754 = vdwg.mxu0
        %755 = vmatprep.subr.bf16.mxu0 0
        %756 = vmatpush1.bf16.msra.mxu0 0
        %757 = vmatprep.subr.bf16.mxu0 0
        %758 = vmatpush1.bf16.msra.mxu0 0
        %759 = vmatprep.subr.bf16.mxu0 %v627
        %760 = vmatpush1.bf16.msra.mxu0 %v624
        %761 = vmatprep.subr.bf16.mxu0 %v497
        %762 = vmatpush1.bf16.msra.mxu0 %v496
        %763 = vmatprep.subr.bf16.mxu0 %v488
        %764 = vmatpush1.bf16.msra.mxu0 %v487
        %765 = vmatprep.subr.bf16.mxu0 %v479
        %766 = vmatpush1.bf16.msra.mxu0 %v478
        %767 = vmatprep.subr.bf16.mxu0 %v470
        %768 = vmatpush1.bf16.msra.mxu0 %v469
        %769 = vmatprep.subr.bf16.mxu0 %v461
        %770 = vmatpush1.bf16.msra.mxu0 %v460
        %771 = vmatprep.subr.bf16.mxu0 0
        %772 = vmatpush2.bf16.msra.mxu0 0
        %773 = vmatprep.subr.bf16.mxu0 0
        %774 = vmatpush2.bf16.msra.mxu0 0
        %775 = vmatprep.subr.bf16.mxu0 0
        %776 = vmatpush2.bf16.msra.mxu0 0
        %777 = vmatprep.subr.bf16.mxu0 0
        %778 = vmatpush2.bf16.msra.mxu0 0
        %779 = vmatprep.subr.bf16.mxu0 0
        %780 = vmatpush2.bf16.msra.mxu0 0
        %781 = vmatprep.subr.bf16.mxu0 0
        %782 = vmatpush2.bf16.msra.mxu0 0
        %783 = vmatprep.subr.bf16.mxu0 0
        %784 = vmatpush2.bf16.msra.mxu0 0
        %785 = vmatprep.subr.bf16.mxu0 0
        %786 = vmatpush2.bf16.msra.mxu0 0
        %787 = vmatprep.mubr.bf16.mxu0 0
        %788 = vmatmul.mubr.bf16.gmra.mxu0 %v602
        %v789 = vpop.f32.mrf.mxu0
        %v790 = vadd.f32 %v582, %v789
        %v791 = vpop.f32.mrf.mxu0
        %v792 = vadd.f32 %v586, %v791
        %v793 = vpop.f32.mrf.mxu0
        %v794 = vpop.f32.mrf.mxu0
        %795 = vdwg.mxu0
        %796 = vmatprep.subr.bf16.mxu0 0
        %797 = vmatpush1.bf16.msra.mxu0 0
        %798 = vmatprep.subr.bf16.mxu0 0
        %799 = vmatpush1.bf16.msra.mxu0 0
        %800 = vmatprep.subr.bf16.mxu0 0
        %801 = vmatpush1.bf16.msra.mxu0 %v630
        %802 = vmatprep.subr.bf16.mxu0 0
        %803 = vmatpush1.bf16.msra.mxu0 %v498
        %804 = vmatprep.subr.bf16.mxu0 0
        %805 = vmatpush1.bf16.msra.mxu0 %v489
        %806 = vmatprep.subr.bf16.mxu0 0
        %807 = vmatpush1.bf16.msra.mxu0 %v480
        %808 = vmatprep.subr.bf16.mxu0 0
        %809 = vmatpush1.bf16.msra.mxu0 %v471
        %810 = vmatprep.subr.bf16.mxu0 0
        %811 = vmatpush1.bf16.msra.mxu0 %v462
        %812 = vmatprep.subr.bf16.mxu0 0
        %813 = vmatpush2.bf16.msra.mxu0 0
        %814 = vmatprep.subr.bf16.mxu0 0
        %815 = vmatpush2.bf16.msra.mxu0 0
        %816 = vmatprep.subr.bf16.mxu0 0
        %817 = vmatpush2.bf16.msra.mxu0 0
        %818 = vmatprep.subr.bf16.mxu0 0
        %819 = vmatpush2.bf16.msra.mxu0 0
        %820 = vmatprep.subr.bf16.mxu0 0
        %821 = vmatpush2.bf16.msra.mxu0 0
        %822 = vmatprep.subr.bf16.mxu0 0
        %823 = vmatpush2.bf16.msra.mxu0 0
        %824 = vmatprep.subr.bf16.mxu0 0
        %825 = vmatpush2.bf16.msra.mxu0 0
        %826 = vmatprep.subr.bf16.mxu0 0
        %827 = vmatpush2.bf16.msra.mxu0 0
        %828 = vmatprep.mubr.bf16.mxu0 0
        %829 = vmatmul.mubr.bf16.gmra.mxu0 %v602
        %v830 = vpop.f32.mrf.mxu0
        %v831 = vadd.f32 %v590, %v830
        %v832 = vpop.f32.mrf.mxu0
        %v833 = vpop.f32.mrf.mxu0
        %v834 = vpop.f32.mrf.mxu0
        %835 = vdwg.mxu0
        %v845 = vcombine.low %v667, %v669
        %v846 = vcombine.low %v708, %v710
        %v847 = vcombine.low %v749, %v751
        %v848 = vcombine.low %v790, %v792
        %v850 = vunpack.c.l.s4 1966171168
        %v851 = vunpack.c.0.s8 %v850
        %v852 = vlaneseq
        %v853 = vshrl.u32 %v852, 7
        %v854 = vsub.s32 %v851, %v853
        %v855 = vrot.slane %v845, %v854
        %v857 = vunpack.c.l.s4 1966171168
        %v858 = vunpack.c.0.s8 %v857
        %v859 = vlaneseq
        %v860 = vshrl.u32 %v859, 7
        %v861 = vsub.s32 %v858, %v860
        %v862 = vrot.slane %v846, %v861
        %v864 = vunpack.c.l.s4 1966171168
        %v865 = vunpack.c.0.s8 %v864
        %v866 = vlaneseq
        %v867 = vshrl.u32 %v866, 7
        %v868 = vsub.s32 %v865, %v867
        %v869 = vrot.slane %v847, %v868
        %v871 = vunpack.c.l.s4 1966171168
        %v872 = vunpack.c.0.s8 %v871
        %v873 = vlaneseq
        %v874 = vshrl.u32 %v873, 7
        %v875 = vsub.s32 %v872, %v874
        %v876 = vrot.slane %v848, %v875
        %v877 = vcombine.low %v855, %v862
        %v878 = vcombine.low %v869, %v876
        %v880 = vunpack.c.l.s4 1966171168
        %v881 = vunpack.c.0.s8 %v880
        %v882 = vlaneseq
        %v883 = vshrl.u32 %v882, 7
        %v884 = vsub.s32 %v881, %v883
        %v885 = vrot.slane %v877, %v884
        %v887 = vunpack.c.l.s4 1966171168
        %v888 = vunpack.c.0.s8 %v887
        %v889 = vlaneseq
        %v890 = vshrl.u32 %v889, 7
        %v891 = vsub.s32 %v888, %v890
        %v892 = vrot.slane %v878, %v891
        %v893 = vcombine.low %v885, %v892
        %v895 = vunpack.c.l.s4 1966171168
        %v896 = vunpack.c.0.s8 %v895
        %v897 = vlaneseq
        %v898 = vshrl.u32 %v897, 7
        %v899 = vsub.s32 %v896, %v898
        %v900 = vrot.slane %v831, %v899
        %v902 = vunpack.c.l.s4 1966171168
        %v903 = vunpack.c.0.s8 %v902
        %v904 = vlaneseq
        %v905 = vshrl.u32 %v904, 7
        %v906 = vsub.s32 %v903, %v905
        %v907 = vrot.slane %v900, %v906
        %910 = vst [vmem:[%s236] sm:$0xff] %v893
        %v911 = vlaneseq
        %vm912 = vcmp.ge.s32.totalorder %v911, 0
        %vm913 = vcmp.lt.s32.totalorder %v911, 128
        %vm914 = vmand %vm912, %vm913
        %915 = vst.msk [vmem:[%s236 + $0x8] sm:$0x1] %vm914, %v907
        %s916 = sand.u32 %s102, 1
        %s917 = scalar_lea.sflag [#allocation4], %s916
        %s918 = sand.u32 %s102, 1
        %s919 = smul.addr %s918, 9
        %s920 = scalar_lea.vmem [#allocation8], %s919
        // Predicated region
        $region45: #{tpu_custom_call.1} parent=31 // pred_check
          %p921 = pneg %p112
        $region46: #{tpu_custom_call.1} parent=31 // pred_check_branch
          %923 = sbr.rel (%p921) target = $region48
        $region47: #{tpu_custom_call.1} parent=31 // pred_region
          %s924 = smul.u32 9, %s21
          %s926 = ssub.s32 144, 144
          %927 = vsyncadd %s917, %s926
          %s928 = smul.addr %s924, 16
          %s929 = scalar_lea.hbm %s3, %s928
          %s931 = sshll.u32 %s920, 4
          %s932 = int_to_ptr.vmem [resolvable:$true] %s931
          %934 = dma.vmem_to_hbm [thread:$0]  %s932, 144, %s929, %s917
        $region48: #{tpu_custom_call.1} parent=31 // pred_fallthru
          _
      $region32: #{tpu_custom_call.1} parent=5 // pred_fallthru
        _
      %p935 = scmp.le.s32.totalorder 2, %s16
      // Predicated region
      $region49: #{tpu_custom_call.1} parent=5 // pred_check
        %p936 = pneg %p935
      $region50: #{tpu_custom_call.1} parent=5 // pred_check_branch
        %938 = sbr.rel (%p936) target = $region52
      $region51: #{tpu_custom_call.1} parent=5 // pred_region
        %s939 = ssub.s32 %s16, 2
        // Predicated region
        $region53: #{tpu_custom_call.1} parent=51 // pred_check
          %p940 = pneg %p118
        $region54: #{tpu_custom_call.1} parent=51 // pred_check_branch
          %942 = sbr.rel (%p940) target = $region56
        $region55: #{tpu_custom_call.1} parent=51 // pred_region
          %s943 = sand.u32 %s103, 1
          %s944 = scalar_lea.sflag [#allocation4], %s943
          %s945 = sand.u32 %s103, 1
          %s946 = smul.addr %s945, 9
          %s947 = scalar_lea.vmem [#allocation8], %s946
          %948 = dma.done %s944, 144
        $region56: #{tpu_custom_call.1} parent=51 // pred_fallthru
          _
      $region52: #{tpu_custom_call.1} parent=5 // pred_fallthru
        _
    $region6: #{tpu_custom_call.1} parent=1 // loop_footer
      %s20 = sadd.s32 1, %s16
    $region7: #{tpu_custom_call.1} parent=1 // loop_footer_branch
      %15 = sbr.rel target = $region3
    $region8: #{tpu_custom_call.1} parent=1 // loop_exit
      _
    %949 = vsyncpa [#allocation3], 1
    %s950 = scalar_lea.sflag [#allocation3], 1
    %951 = vsyncpa %s950, 1
    %952 = vsyncpa [#allocation6], 1
    %s953 = scalar_lea.sflag [#allocation6], 1
    %954 = vsyncpa %s953, 1
    %955 = vsyncpa [#allocation4], 1
    %s956 = scalar_lea.sflag [#allocation4], 1
    %957 = vsyncpa %s956, 1

</llo_original>
